<compile_context>
chip_gen: v6e
topology: v6e:2x2x1
jax: 0.10.0
libtpu: 0.0.40
codegen_flags: <defaults>
</compile_context>

<pallas_src>
import functools

import jax
import jax.numpy as jnp
from jax.experimental import pallas as pl
from jax.experimental.pallas import tpu as pltpu


def _round_up(x, m):
    return (x + m - 1) // m * m


# ----------------------------------------------------------------------------
# Kernel 1: tiled neighbor scores (the find_neighbors hot path).
# ----------------------------------------------------------------------------
def _knn_score_kernel(src_ref, dst_ref, d2_ref, out_ref, *, bm, m_valid, mask_cols):
    dot = jax.lax.dot_general(                         # (bn, bm) on MXU, bf16 in / f32 acc
        src_ref[...], dst_ref[...], (((1,), (1,)), ((), ())),
        preferred_element_type=jnp.float32)
    score = 2.0 * dot - d2_ref[...]                    # same row ordering as -dist^2
    if mask_cols:
        j = pl.program_id(1)
        col = jax.lax.broadcasted_iota(jnp.int32, score.shape, 1) + j * bm
        score = jnp.where(col < m_valid, score, -jnp.inf)
    out_ref[...] = score.astype(out_ref.dtype)


def neighbor_scores(src, dst, *, block_n=512, block_m=1024,
                    score_dtype=jnp.bfloat16):
    """(Np, Mp) score matrix whose per-row top-k == k nearest dst per src."""
    N, D = src.shape
    M = dst.shape[0]

    # Full-extent blocks for small problems, (8,128)-aligned tiles otherwise.
    if N <= block_n:
        bn, Np = N, N
    else:
        bn, Np = block_n, _round_up(N, block_n)
    if M <= block_m:
        bm, Mp = M, M
    else:
        bm, Mp = block_m, _round_up(M, block_m)

    src_p = src if Np == N else jnp.pad(src, ((0, Np - N), (0, 0)))
    dst_p = dst if Mp == M else jnp.pad(dst, ((0, Mp - M), (0, 0)))
    d2_p = jnp.sum(dst_p * dst_p, axis=1)[None, :]     # (1, Mp) f32, exact norms
    src_b = src_p.astype(jnp.bfloat16)                 # halve MXU operand bytes
    dst_b = dst_p.astype(jnp.bfloat16)

    kern = functools.partial(_knn_score_kernel, bm=bm, m_valid=M,
                             mask_cols=(Mp != M))
    return pl.pallas_call(
        kern,
        out_shape=jax.ShapeDtypeStruct((Np, Mp), score_dtype),
        grid=(Np // bn, Mp // bm),
        in_specs=[
            pl.BlockSpec((bn, D), lambda i, j: (i, 0)),
            pl.BlockSpec((bm, D), lambda i, j: (j, 0)),
            pl.BlockSpec((1, bm), lambda i, j: (0, j)),
        ],
        out_specs=pl.BlockSpec((bn, bm), lambda i, j: (i, j)),
        compiler_params=pltpu.CompilerParams(
            dimension_semantics=("parallel", "parallel"),
            vmem_limit_bytes=48 * 1024 * 1024),
    )(src_b, dst_b, d2_p)


# ----------------------------------------------------------------------------
# Kernel 2a: masked BatchNorm1d(1) batch statistics, tiled over edge rows.
# ----------------------------------------------------------------------------
def _edge_stats_kernel(lm_ref, s1_ref, s2_ref):
    @pl.when(pl.program_id(0) == 0)
    def _():
        s1_ref[...] = jnp.zeros_like(s1_ref)
        s2_ref[...] = jnp.zeros_like(s2_ref)
    lm = lm_ref[...]                                   # pre-masked likelihood (tr, 128)
    s1_ref[...] += jnp.sum(lm, axis=None, keepdims=True)
    s2_ref[...] += jnp.sum(lm * lm, axis=None, keepdims=True)


# ----------------------------------------------------------------------------
# Kernel 2b: normalize + weighting function, tiled over edge rows (parallel).
# ----------------------------------------------------------------------------
def _edge_apply_kernel(params_ref, lm_ref, mask_ref, logits_ref, w_ref, *, weighting):
    mean = params_ref[0]
    scale = params_ref[1]     # gamma / sqrt(var + eps)
    beta = params_ref[2]

    lm = lm_ref[...]
    m = mask_ref[...].astype(jnp.float32)              # bf16 mask stream
    logits = ((lm - mean) * scale + beta) * m

    if weighting == "sigmoid":
        w = 1.0 / (1.0 + jnp.exp(-logits))
    elif weighting == "exp":
        w = jnp.exp(logits)
    else:
        raise ValueError(f"unsupported weighting_function: {weighting}")

    logits_ref[...] = logits
    w_ref[...] = w * m


def edge_weights_pipeline(lik_masked, mask, cnt, gamma, beta, eps, *,
                          norm, weighting, tile_rows=512):
    """lik_masked/mask: (E,) f32 (mask 0/1). Returns (logits (E,), weights (E,))."""
    E = lik_masked.shape[0]
    rows = _round_up(max(-(-E // 128), 8), 8)
    tr = min(tile_rows, rows)
    R = _round_up(rows, tr)
    E_pad = R * 128
    pad = E_pad - E
    lm_p = jnp.pad(lik_masked, (0, pad)).reshape(R, 128)
    mk_p = jnp.pad(mask, (0, pad)).reshape(R, 128).astype(jnp.bfloat16)

    # --- stats pass (sequential accumulation over row tiles) ---
    s1, s2 = pl.pallas_call(
        _edge_stats_kernel,
        out_shape=(jax.ShapeDtypeStruct((1, 1), jnp.float32),
                   jax.ShapeDtypeStruct((1, 1), jnp.float32)),
        grid=(R // tr,),
        in_specs=[pl.BlockSpec((tr, 128), lambda i: (i, 0))],
        out_specs=(pl.BlockSpec((1, 1), lambda i: (0, 0)),
                   pl.BlockSpec((1, 1), lambda i: (0, 0))),
        compiler_params=pltpu.CompilerParams(
            dimension_semantics=("arbitrary",)),
    )(lm_p)

    cnt_safe = jnp.maximum(cnt, 1.0)
    mean = s1[0, 0] / cnt_safe
    var = jnp.maximum(s2[0, 0] / cnt_safe - mean * mean, 0.0)   # biased (BN training mode)
    scale = gamma * jax.lax.rsqrt(var + eps)
    params = jnp.stack([mean, scale, jnp.asarray(beta, jnp.float32)]).astype(jnp.float32)

    # --- apply pass (independent row tiles; both TCs on v7x) ---
    kern = functools.partial(_edge_apply_kernel, weighting=weighting)
    logits_2d, w_2d = pl.pallas_call(
        kern,
        out_shape=(jax.ShapeDtypeStruct((R, 128), jnp.float32),
                   jax.ShapeDtypeStruct((R, 128), jnp.float32)),
        grid=(R // tr,),
        in_specs=[
            pl.BlockSpec(memory_space=pltpu.MemorySpace.SMEM),   # [mean, scale, beta]
            pl.BlockSpec((tr, 128), lambda i: (i, 0)),
            pl.BlockSpec((tr, 128), lambda i: (i, 0)),
        ],
        out_specs=(pl.BlockSpec((tr, 128), lambda i: (i, 0)),
                   pl.BlockSpec((tr, 128), lambda i: (i, 0))),
        compiler_params=pltpu.CompilerParams(
            dimension_semantics=("parallel",)),
    )(params, lm_p, mk_p)

    logits_e = logits_2d.reshape(E_pad)[:E]
    w_e = w_2d.reshape(E_pad)[:E]
    if norm:
        # edge_weights /= edge_weights.mean() over real edges: one scalar
        # reciprocal + scalar multiply (NaN-guarded when all edges masked).
        sum_w = jnp.sum(w_2d)                          # padded/masked entries are 0
        w_mean = sum_w / cnt_safe
        inv = jnp.where(w_mean > 0.0, 1.0 / w_mean, 0.0)
        w_e = w_e * inv
    return logits_e, w_e


# ----------------------------------------------------------------------------
# Forward pass (mirrors DynamicGraphConstruction.forward with sym=False).
# ----------------------------------------------------------------------------
def dynamic_graph_construction(src_emb, dst_emb, knn_radius, bn_weight, bn_bias,
                               *, k=8, norm=True, logits=False, training=True,
                               weighting_function="sigmoid", bn_eps=1e-5,
                               block_n=512, block_m=1024, edge_tile_rows=512):
    N, D = src_emb.shape
    M = dst_emb.shape[0]
    E = N * k

    # Stage 1: scores + k-nearest selection.  top_k consumes the score matrix
    # directly (higher = closer); padded columns were masked to -inf in-kernel.
    scores = neighbor_scores(src_emb, dst_emb, block_n=block_n, block_m=block_m)
    _, top_idx = jax.lax.top_k(scores, k)              # (Np, k)
    top_idx = top_idx[:N]                              # drop padded rows (tiny)

    # Exact per-edge quantities on the small (N, k) neighbor set (no
    # ||s||^2 + ||d||^2 - dist^2 cancellation path).
    safe_idx = jnp.minimum(top_idx, M - 1)
    dst_gath = dst_emb[safe_idx]                       # (N, k, D) gather
    diff = src_emb[:, None, :] - dst_gath
    d2 = jnp.sum(diff * diff, axis=-1)                 # (N, k) exact squared dist
    lik = jnp.einsum('nd,nkd->nk', src_emb, dst_gath)  # (N, k) exact dot product

    r2 = knn_radius[0] * knn_radius[0]
    within = d2 <= r2                                  # find_neighbors radius cut

    # Edge list: fixed-size, -1 padded (no static-shape dynamic compaction).
    src_flat = jnp.repeat(jnp.arange(N, dtype=jnp.int32), k)
    dst_flat = jnp.where(within, top_idx, -1).astype(jnp.int32).reshape(E)
    valid = within.reshape(E)
    graph = jnp.stack([jnp.where(valid, src_flat, -1), dst_flat], axis=0)

    cnt = jnp.sum(valid.astype(jnp.float32))
    lm = jnp.where(within, lik, 0.0).reshape(E)
    maskf = within.astype(jnp.float32).reshape(E)

    edge_weights_logits, w_e = edge_weights_pipeline(
        lm, maskf, cnt, float(bn_weight), float(bn_bias), float(bn_eps),
        norm=norm, weighting=weighting_function, tile_rows=edge_tile_rows)
    edge_weights = w_e.reshape(E, 1)

    new_radius = knn_radius
    if training:
        # self.knn_radius = 0.9 * self.knn_radius + 0.11 * maximum_dist
        maximum_dist = jnp.sqrt(jnp.max(jnp.where(within, d2, 0.0)))
        new_radius = 0.9 * knn_radius + 0.11 * maximum_dist

    if logits:
        return graph, edge_weights, edge_weights_logits, valid, new_radius
    return graph, edge_weights, valid, new_radius


if __name__ == "__main__":
    key = jax.random.PRNGKey(0)
    k1, k2 = jax.random.split(key)
    N, M, D, K = 160, 200, 32, 8

    # Small embedding scale so the knn_radius buffer init (1.0) yields real edges.
    src = 0.1 * jax.random.normal(k1, (N, D), dtype=jnp.float32)
    dst = 0.1 * jax.random.normal(k2, (M, D), dtype=jnp.float32)

    knn_radius = jnp.ones((1,), jnp.float32)   # register_buffer('knn_radius', ones(1))

    graph, edge_weights, edge_logits, valid, new_radius = dynamic_graph_construction(
        src, dst, knn_radius, bn_weight=1.0, bn_bias=0.0,
        k=K, norm=True, logits=True, training=True,
        weighting_function="sigmoid",
        # small tiles so the multi-tile grid, padded-column masking and the
        # multi-row-tile edge pipeline are all exercised at demo scale
        block_n=64, block_m=128, edge_tile_rows=8)
    jax.block_until_ready((graph, edge_weights, edge_logits, valid, new_radius))

    E = N * K
    assert graph.shape == (2, E)
    assert edge_weights.shape == (E, 1)
    assert edge_logits.shape == (E,)
    assert valid.shape == (E,)
    assert new_radius.shape == (1,)
    assert bool(jnp.all(jnp.isfinite(edge_weights)))
    assert bool(jnp.all(jnp.isfinite(edge_logits)))
    assert bool(jnp.all(jnp.isfinite(new_radius)))
    assert bool(jnp.any(valid))
    assert bool(jnp.all(jnp.where(valid, graph[1] >= 0, graph[1] == -1)))
    assert bool(jnp.all(graph[1] < M))
    # norm=True => mean of weights over real edges == 1
    vf = valid.astype(jnp.float32)
    w_mean_valid = jnp.sum(edge_weights[:, 0] * vf) / jnp.maximum(jnp.sum(vf), 1.0)
    assert abs(float(w_mean_valid) - 1.0) < 1e-3
    print("KERNEL_OK")
</pallas_src>

<mosaic_0001>
module attributes {stable_mosaic.version = 11 : i64} {
  func.func @_knn_score_kernel(%arg0: i32, %arg1: i32, %arg2: memref<64x32xbf16, #tpu.memory_space<vmem>>, %arg3: memref<128x32xbf16, #tpu.memory_space<vmem>>, %arg4: memref<1x128xf32, #tpu.memory_space<vmem>>, %arg5: memref<64x128xbf16, #tpu.memory_space<vmem>>) attributes {dimension_semantics = [#tpu.dimension_semantics<parallel>, #tpu.dimension_semantics<parallel>], iteration_bounds = array<i64: 3, 2>, scalar_prefetch = 0 : i64, scratch_operands = 0 : i64, tpu.core_type = #tpu.core_type<tc>, window_params = [{transform_indices = @transform_0, window_bounds = array<i64: 64, 32>}, {transform_indices = @transform_1, window_bounds = array<i64: 128, 32>}, {transform_indices = @transform_2, window_bounds = array<i64: 1, 128>}, {transform_indices = @transform_3, window_bounds = array<i64: 64, 128>}]} {
    %c0 = arith.constant 0 : index
    %c0_0 = arith.constant 0 : index
    %0 = vector.load %arg2[%c0, %c0_0] : memref<64x32xbf16, #tpu.memory_space<vmem>>, vector<64x32xbf16>
    %c0_1 = arith.constant 0 : index
    %c0_2 = arith.constant 0 : index
    %1 = vector.load %arg3[%c0_1, %c0_2] : memref<128x32xbf16, #tpu.memory_space<vmem>>, vector<128x32xbf16>
    %cst = arith.constant dense<0.000000e+00> : vector<64x128xf32>
    %2 = tpu.matmul %0, %1, %cst {dimension_numbers = #tpu.dot_dimension_numbers<[1], [1], [0], [0], [0, 0, 1, 0], [], []>} : vector<64x32xbf16>, vector<128x32xbf16>, vector<64x128xf32> -> vector<64x128xf32>
    %cst_3 = arith.constant 2.000000e+00 : f32
    %3 = vector.broadcast %cst_3 : f32 to vector<64x128xf32>
    %4 = arith.mulf %3, %2 : vector<64x128xf32>
    %c0_4 = arith.constant 0 : index
    %c0_5 = arith.constant 0 : index
    %5 = vector.load %arg4[%c0_4, %c0_5] : memref<1x128xf32, #tpu.memory_space<vmem>>, vector<1x128xf32>
    %6 = vector.broadcast %5 : vector<1x128xf32> to vector<64x128xf32>
    %7 = arith.subf %4, %6 : vector<64x128xf32>
    %8 = tpu.iota {dimensions = array<i32: 1>} : vector<64x128xi32>
    %c128_i32 = arith.constant 128 : i32
    %9 = arith.muli %arg1, %c128_i32 : i32
    %10 = vector.broadcast %9 : i32 to vector<64x128xi32>
    %11 = arith.addi %8, %10 : vector<64x128xi32>
    %c200_i32 = arith.constant 200 : i32
    %12 = vector.broadcast %c200_i32 : i32 to vector<64x128xi32>
    %13 = arith.cmpi slt, %11, %12 : vector<64x128xi32>
    %cst_6 = arith.constant 0xFF800000 : f32
    %14 = vector.broadcast %cst_6 : f32 to vector<64x128xf32>
    %15 = arith.select %13, %7, %14 : vector<64x128xi1>, vector<64x128xf32>
    %16 = arith.truncf %15 : vector<64x128xf32> to vector<64x128xbf16>
    %c0_7 = arith.constant 0 : index
    %c0_8 = arith.constant 0 : index
    %17 = vector.load %arg5[%c0_7, %c0_8] : memref<64x128xbf16, #tpu.memory_space<vmem>>, vector<64x128xbf16>
    tpu.vector_store %arg5[%c0_7, %c0_8], %16 {strides = array<i32>} : memref<64x128xbf16, #tpu.memory_space<vmem>>, vector<64x128xbf16>,
    return
  }
  func.func @transform_0(%arg0: i32, %arg1: i32) -> (i32, i32) {
    %c0_i32 = arith.constant 0 : i32
    %c0_i32_0 = arith.constant 0 : i32
    return %arg0, %c0_i32 : i32, i32
  }
  func.func @transform_1(%arg0: i32, %arg1: i32) -> (i32, i32) {
    %c0_i32 = arith.constant 0 : i32
    %c0_i32_0 = arith.constant 0 : i32
    return %arg1, %c0_i32 : i32, i32
  }
  func.func @transform_2(%arg0: i32, %arg1: i32) -> (i32, i32) {
    %c0_i32 = arith.constant 0 : i32
    %c0_i32_0 = arith.constant 0 : i32
    return %c0_i32, %arg1 : i32, i32
  }
  func.func @transform_3(%arg0: i32, %arg1: i32) -> (i32, i32) {
    %c0_i32 = arith.constant 0 : i32
    return %arg0, %arg1 : i32, i32
  }
}

</mosaic_0001>

<llo_original>
// kernel: tpu_custom_call.1
$region0: #{tpu_custom_call.1}
  #allocation0 [shape = 'u32[]', space=smem, size = 0x4, offset = 0x4, fixed_abs, tag = 'smem constant byte address 0x4 - core index']
  #allocation1 [shape = 'u32[144,128]{1,0:T(1,128)}', space=vmem, size = 0x12000, scoped, tag = 'internal scratch']
  %s0 = inlined_call_operand.vmem [shape: bf16[192,32], index: 0, kind: input, shape index: {}]
  %s1 = inlined_call_operand.vmem [shape: bf16[256,32], index: 1, kind: input, shape index: {}]
  %s2 = inlined_call_operand.vmem [shape: f32[1,256], index: 2, kind: input, shape index: {}]
  %s3 = inlined_call_operand.hbm [shape: bf16[192,256], index: 3, kind: output, shape index: {}]
  %s4 = sld [smem:[#allocation0]]
  $region45: #{tpu_custom_call.1} parent=0
    _
  %s6 = ssub.s32 1, %s4
  %s7 = scalar_select 0, %s6, %s4
  $region1: #{tpu_custom_call.1} parent=0
    #allocation2 [shape = 'u8[32768]{0}', space=vmem, size = 0x8000, scoped, tag = 'output window, operand 0']
    #allocation3 [shape = 's32[2]{0}', space=sflag, size = 0x8, scoped, tag = 'scoped memory for tpu_custom_call.1']
    %8 = vsyncpa [#allocation3], 0
    %s9 = scalar_lea.sflag [#allocation3], 1
    %10 = vsyncpa %s9, 0
    loop: start=0, step=1, limit=8
    $region2: #{tpu_custom_call.1} parent=1 // loop_pre_header
      _
    $region3: #{tpu_custom_call.1} parent=1 // loop_header
      %s12 = sphi 0, %s16
      %p13 = scmp.ge.s32.totalorder %s12, 8
      %s19 = sphi 0, %s31
      %s20 = sphi 0, %s27
      %s21 = sphi 0, %s19
      %s22 = sphi 0, %s20
      %s23 = sphi 0, %s21
      %s24 = sphi 0, %s22
      %s34 = sphi 0, %s36
      %s37 = sphi 0, %s34
      %s38 = sphi 0, %s37
      %s54 = sphi 0, %s38
      %s60 = sphi 0, %s62
      %s63 = sphi 0, %s60
      %s64 = sphi 0, %s63
      %s80 = sphi 0, %s64
      %s86 = sphi 0, %s88
      %s89 = sphi 0, %s86
      %s90 = sphi 0, %s89
      %s106 = sphi 0, %s90
      %s114 = sphi 0, %s116
      %s117 = sphi 0, %s114
      %s118 = sphi 0, %s117
      %s134 = sphi 0, %s118
    $region4: #{tpu_custom_call.1} parent=1 // loop_header_branch
      %15 = sbr.rel (%p13) target = $region8
    $region5: #{tpu_custom_call.1} parent=1 // loop_body
      %s17 = ssub.s32 %s12, 1
      %s18 = ssub.s32 %s12, 2
      %s25 = sadd.s32 1, %s20
      %p26 = scmp.ge.s32.totalorder %s25, 2
      %s27 = scalar_select %p26, 0, %s25
      %s28 = sadd.s32 1, %s19
      %s29 = scalar_select %p26, %s28, %s19
      %p30 = scmp.ge.s32.totalorder %s29, 3
      %s31 = scalar_select %p30, 0, %s29
      %s32 = ssub.s32 %s19, %s31
      %p33 = scmp.eq.s32.totalorder %s32, 0
      %s35 = sadd.s32 %s34, 1
      %s36 = scalar_select %p33, %s34, %s35
      %p39 = pneg %p33
      %p40 = scmp.eq.s32.totalorder %s12, 5
      %p41 = por %p39, %p40
      %p42 = scmp.ne.s32.totalorder %s34, %s37
      %p43 = scmp.eq.s32.totalorder %s12, 0
      %p44 = por %p42, %p43
      %p45 = scmp.ne.s32.totalorder %s34, %s37
      %p46 = scmp.eq.s32.totalorder %s17, 5
      %p47 = por %p45, %p46
      %p48 = scmp.ne.s32.totalorder %s37, %s38
      %p49 = scmp.eq.s32.totalorder %s17, 0
      %p50 = por %p48, %p49
      %p51 = scmp.ne.s32.totalorder %s37, %s38
      %p52 = scmp.eq.s32.totalorder %s18, 5
      %p53 = por %p51, %p52
      %p55 = scmp.ne.s32.totalorder %s38, %s54
      %p56 = scmp.eq.s32.totalorder %s18, 0
      %p57 = por %p55, %p56
      %s58 = ssub.s32 %s20, %s27
      %p59 = scmp.eq.s32.totalorder %s58, 0
      %s61 = sadd.s32 %s60, 1
      %s62 = scalar_select %p59, %s60, %s61
      %p65 = pneg %p59
      %p66 = scmp.eq.s32.totalorder %s12, 5
      %p67 = por %p65, %p66
      %p68 = scmp.ne.s32.totalorder %s60, %s63
      %p69 = scmp.eq.s32.totalorder %s12, 0
      %p70 = por %p68, %p69
      %p71 = scmp.ne.s32.totalorder %s60, %s63
      %p72 = scmp.eq.s32.totalorder %s17, 5
      %p73 = por %p71, %p72
      %p74 = scmp.ne.s32.totalorder %s63, %s64
      %p75 = scmp.eq.s32.totalorder %s17, 0
      %p76 = por %p74, %p75
      %p77 = scmp.ne.s32.totalorder %s63, %s64
      %p78 = scmp.eq.s32.totalorder %s18, 5
      %p79 = por %p77, %p78
      %p81 = scmp.ne.s32.totalorder %s64, %s80
      %p82 = scmp.eq.s32.totalorder %s18, 0
      %p83 = por %p81, %p82
      %s84 = ssub.s32 %s20, %s27
      %p85 = scmp.eq.s32.totalorder %s84, 0
      %s87 = sadd.s32 %s86, 1
      %s88 = scalar_select %p85, %s86, %s87
      %p91 = pneg %p85
      %p92 = scmp.eq.s32.totalorder %s12, 5
      %p93 = por %p91, %p92
      %p94 = scmp.ne.s32.totalorder %s86, %s89
      %p95 = scmp.eq.s32.totalorder %s12, 0
      %p96 = por %p94, %p95
      %p97 = scmp.ne.s32.totalorder %s86, %s89
      %p98 = scmp.eq.s32.totalorder %s17, 5
      %p99 = por %p97, %p98
      %p100 = scmp.ne.s32.totalorder %s89, %s90
      %p101 = scmp.eq.s32.totalorder %s17, 0
      %p102 = por %p100, %p101
      %p103 = scmp.ne.s32.totalorder %s89, %s90
      %p104 = scmp.eq.s32.totalorder %s18, 5
      %p105 = por %p103, %p104
      %p107 = scmp.ne.s32.totalorder %s90, %s106
      %p108 = scmp.eq.s32.totalorder %s18, 0
      %p109 = por %p107, %p108
      %s110 = ssub.s32 %s19, %s31
      %s111 = ssub.s32 %s20, %s27
      %s112 = sor.u32 %s110, %s111
      %p113 = scmp.eq.s32.totalorder %s112, 0
      %s115 = sadd.s32 %s114, 1
      %s116 = scalar_select %p113, %s114, %s115
      %p119 = pneg %p113
      %p120 = scmp.eq.s32.totalorder %s12, 5
      %p121 = por %p119, %p120
      %p122 = scmp.ne.s32.totalorder %s114, %s117
      %p123 = scmp.eq.s32.totalorder %s12, 0
      %p124 = por %p122, %p123
      %p125 = scmp.ne.s32.totalorder %s114, %s117
      %p126 = scmp.eq.s32.totalorder %s17, 5
      %p127 = por %p125, %p126
      %p128 = scmp.ne.s32.totalorder %s117, %s118
      %p129 = scmp.eq.s32.totalorder %s17, 0
      %p130 = por %p128, %p129
      %p131 = scmp.ne.s32.totalorder %s117, %s118
      %p132 = scmp.eq.s32.totalorder %s18, 5
      %p133 = por %p131, %p132
      %p135 = scmp.ne.s32.totalorder %s118, %s134
      %p136 = scmp.eq.s32.totalorder %s18, 0
      %p137 = por %p135, %p136
      %p138 = scmp.le.s32.totalorder 1, %s12
      %p139 = scmp.lt.s32.totalorder %s12, 7
      %p140 = pnand %p138, %p139
      %p141 = pneg %p140
      // Predicated region
      $region9: #{tpu_custom_call.1} parent=5 // pred_check
        _
      $region10: #{tpu_custom_call.1} parent=5 // pred_check_branch
        %143 = sbr.rel (%p140) target = $region12
      $region11: #{tpu_custom_call.1} parent=5 // pred_region
        %s144 = ssub.s32 %s12, 1
      $region12: #{tpu_custom_call.1} parent=5 // pred_fallthru
        _
      %p145 = scmp.lt.s32.totalorder %s12, 6
      // Predicated region
      $region13: #{tpu_custom_call.1} parent=5 // pred_check
        %p146 = pneg %p145
      $region14: #{tpu_custom_call.1} parent=5 // pred_check_branch
        %148 = sbr.rel (%p146) target = $region16
      $region15: #{tpu_custom_call.1} parent=5 // pred_region
        // Predicated region
        $region17: #{tpu_custom_call.1} parent=15 // pred_check
          %p149 = pneg %p44
        $region18: #{tpu_custom_call.1} parent=15 // pred_check_branch
          %151 = sbr.rel (%p149) target = $region20
        $region19: #{tpu_custom_call.1} parent=15 // pred_region
          %s152 = smul.u32 8, %s19
          %p153 = scmp.lt.s32.totalorder %s152, 23
          %s154 = scalar_select %p153, %s152, 23
          %s155 = smul.addr %s154, 4
          %s156 = scalar_lea.vmem %s0, %s155
          %s157 = smul.u32 8, %s19
        $region20: #{tpu_custom_call.1} parent=15 // pred_fallthru
          _
        // Predicated region
        $region21: #{tpu_custom_call.1} parent=15 // pred_check
          %p158 = pneg %p70
        $region22: #{tpu_custom_call.1} parent=15 // pred_check_branch
          %160 = sbr.rel (%p158) target = $region24
        $region23: #{tpu_custom_call.1} parent=15 // pred_region
          %s161 = smul.u32 16, %s20
          %p162 = scmp.lt.s32.totalorder %s161, 31
          %s163 = scalar_select %p162, %s161, 31
          %s164 = smul.addr %s163, 4
          %s165 = scalar_lea.vmem %s1, %s164
          %s166 = smul.u32 16, %s20
        $region24: #{tpu_custom_call.1} parent=15 // pred_fallthru
          _
        // Predicated region
        $region25: #{tpu_custom_call.1} parent=15 // pred_check
          %p167 = pneg %p96
        $region26: #{tpu_custom_call.1} parent=15 // pred_check_branch
          %169 = sbr.rel (%p167) target = $region28
        $region27: #{tpu_custom_call.1} parent=15 // pred_region
          %p170 = scmp.lt.s32.totalorder %s20, 1
          %s171 = scalar_select %p170, %s20, 1
          %s172 = scalar_lea.vmem %s2, %s171
        $region28: #{tpu_custom_call.1} parent=15 // pred_fallthru
          _
      $region16: #{tpu_custom_call.1} parent=5 // pred_fallthru
        _
      %p173 = scmp.le.s32.totalorder 1, %s12
      %p174 = scmp.lt.s32.totalorder %s12, 7
      %p175 = pnand %p173, %p174
      %p176 = pneg %p175
      // Predicated region
      $region29: #{tpu_custom_call.1} parent=5 // pred_check
        _
      $region30: #{tpu_custom_call.1} parent=5 // pred_check_branch
        %178 = sbr.rel (%p175) target = $region32
      $region31: #{tpu_custom_call.1} parent=5 // pred_region
        %s179 = ssub.s32 %s12, 1
        %s180 = smul.u32 8, %s21
        %p181 = scmp.lt.s32.totalorder %s180, 23
        %s182 = scalar_select %p181, %s180, 23
        %s183 = smul.addr %s182, 4
        %s184 = scalar_lea.vmem %s0, %s183
        %p185 = pneg %p50
        %p186 = pneg %p47
        %s187 = smul.u32 16, %s22
        %p188 = scmp.lt.s32.totalorder %s187, 31
        %s189 = scalar_select %p188, %s187, 31
        %s190 = smul.addr %s189, 4
        %s191 = scalar_lea.vmem %s1, %s190
        %p192 = pneg %p76
        %p193 = pneg %p73
        %p194 = scmp.lt.s32.totalorder %s22, 1
        %s195 = scalar_select %p194, %s22, 1
        %s196 = scalar_lea.vmem %s2, %s195
        %p197 = pneg %p102
        %p198 = pneg %p99
        %p199 = pneg %p130
        %p200 = pneg %p127
        %s201 = sand.u32 %s117, 1
        %s202 = scalar_lea.sflag [#allocation3], %s201
        %s203 = sand.u32 %s117, 1
        %s204 = smul.addr %s203, 32
        %s205 = scalar_lea.vmem [#allocation2], %s204
        %s206 = smul.u32 8, %s21
        %p207 = scmp.lt.s32.totalorder %s206, 23
        %s208 = scalar_select %p207, %s206, 23
        %s209 = smul.addr %s208, 4
        %s210 = scalar_lea.vmem %s0, %s209
        %s211 = smul.u32 8, %s21
        %s212 = smul.u32 16, %s22
        %p213 = scmp.lt.s32.totalorder %s212, 31
        %s214 = scalar_select %p213, %s212, 31
        %s215 = smul.addr %s214, 4
        %s216 = scalar_lea.vmem %s1, %s215
        %s217 = smul.u32 16, %s22
        %p218 = scmp.lt.s32.totalorder %s22, 1
        %s219 = scalar_select %p218, %s22, 1
        %s220 = scalar_lea.vmem %s2, %s219
        %s221 = smul.u32 8, %s21
        %v223 = vld [vmem:[%s210] sm:$0xf]
        %v224 = vld [vmem:[%s210 + $0x4] sm:$0xf]
        %v225 = vld [vmem:[%s210 + $0x8] sm:$0xf]
        %v226 = vld [vmem:[%s210 + $0xc] sm:$0xf]
        %v227 = vld [vmem:[%s210 + $0x10] sm:$0xf]
        %v228 = vld [vmem:[%s210 + $0x14] sm:$0xf]
        %v229 = vld [vmem:[%s210 + $0x18] sm:$0xf]
        %v230 = vld [vmem:[%s210 + $0x1c] sm:$0xf]
        %v231 = vld [vmem:[%s216] sm:$0xf]
        %v232 = vld [vmem:[%s216 + $0x4] sm:$0xf]
        %v233 = vld [vmem:[%s216 + $0x8] sm:$0xf]
        %v234 = vld [vmem:[%s216 + $0xc] sm:$0xf]
        %v235 = vld [vmem:[%s216 + $0x10] sm:$0xf]
        %v236 = vld [vmem:[%s216 + $0x14] sm:$0xf]
        %v237 = vld [vmem:[%s216 + $0x18] sm:$0xf]
        %v238 = vld [vmem:[%s216 + $0x1c] sm:$0xf]
        %v239 = vld [vmem:[%s216 + $0x20] sm:$0xf]
        %v240 = vld [vmem:[%s216 + $0x24] sm:$0xf]
        %v241 = vld [vmem:[%s216 + $0x28] sm:$0xf]
        %v242 = vld [vmem:[%s216 + $0x2c] sm:$0xf]
        %v243 = vld [vmem:[%s216 + $0x30] sm:$0xf]
        %v244 = vld [vmem:[%s216 + $0x34] sm:$0xf]
        %v245 = vld [vmem:[%s216 + $0x38] sm:$0xf]
        %v246 = vld [vmem:[%s216 + $0x3c] sm:$0xf]
        %v255 = vunpack.c.l.b16 %v223
        %v256 = vunpack.c.l.b16 %v224
        %v257 = vunpack.c.l.b16 %v225
        %v258 = vunpack.c.l.b16 %v226
        %v259 = vunpack.c.l.b16 %v227
        %v260 = vunpack.c.l.b16 %v228
        %v261 = vunpack.c.l.b16 %v229
        %v262 = vunpack.c.l.b16 %v230
        %v263 = vpack.c.b16 %v256, %v255
        %v264 = vpack.c.b16 %v258, %v257
        %v265 = vpack.c.b16 %v260, %v259
        %v266 = vpack.c.b16 %v262, %v261
        %v283 = vunpack.c.l.b16 %v231
        %v284 = vunpack.c.l.b16 %v232
        %v285 = vunpack.c.l.b16 %v233
        %v286 = vunpack.c.l.b16 %v234
        %v287 = vunpack.c.l.b16 %v235
        %v288 = vunpack.c.l.b16 %v236
        %v289 = vunpack.c.l.b16 %v237
        %v290 = vunpack.c.l.b16 %v238
        %v291 = vunpack.c.l.b16 %v239
        %v292 = vunpack.c.l.b16 %v240
        %v293 = vunpack.c.l.b16 %v241
        %v294 = vunpack.c.l.b16 %v242
        %v295 = vunpack.c.l.b16 %v243
        %v296 = vunpack.c.l.b16 %v244
        %v297 = vunpack.c.l.b16 %v245
        %v298 = vunpack.c.l.b16 %v246
        %v299 = vpack.c.b16 %v284, %v283
        %v300 = vpack.c.b16 %v286, %v285
        %v301 = vpack.c.b16 %v288, %v287
        %v302 = vpack.c.b16 %v290, %v289
        %v303 = vpack.c.b16 %v292, %v291
        %v304 = vpack.c.b16 %v294, %v293
        %v305 = vpack.c.b16 %v296, %v295
        %v306 = vpack.c.b16 %v298, %v297
        %vm307 = vcmask 261120
        %v309 = vsel %vm307, %v263, 0
        %v312 = vsel %vm307, %v264, 0
        %v315 = vsel %vm307, %v265, 0
        %v318 = vsel %vm307, %v266, 0
        %v321 = vsel %vm307, %v299, 0
        %v324 = vsel %vm307, %v300, 0
        %v327 = vsel %vm307, %v301, 0
        %v330 = vsel %vm307, %v302, 0
        %v333 = vsel %vm307, %v303, 0
        %v336 = vsel %vm307, %v304, 0
        %v339 = vsel %vm307, %v305, 0
        %v342 = vsel %vm307, %v306, 0
        %344 = vmatprep.subr.bf16.mxu0 0
        %345 = vmatpush1.bf16.xpose.msra.mxu0 %v342
        %346 = vmatprep.subr.bf16.mxu0 0
        %347 = vmatpush1.bf16.xpose.msra.mxu0 %v339
        %348 = vmatprep.subr.bf16.mxu0 0
        %349 = vmatpush1.bf16.xpose.msra.mxu0 %v336
        %350 = vmatprep.subr.bf16.mxu0 0
        %351 = vmatpush1.bf16.xpose.msra.mxu0 %v333
        %352 = vmatprep.subr.bf16.mxu0 0
        %353 = vmatpush1.bf16.xpose.msra.mxu0 %v330
        %354 = vmatprep.subr.bf16.mxu0 0
        %355 = vmatpush1.bf16.xpose.msra.mxu0 %v327
        %356 = vmatprep.subr.bf16.mxu0 0
        %357 = vmatpush1.bf16.xpose.msra.mxu0 %v324
        %358 = vmatprep.subr.bf16.mxu0 0
        %359 = vmatpush1.bf16.xpose.msra.mxu0 %v321
        %360 = vmatprep.subr.bf16.mxu0 0
        %361 = vmatpush2.bf16.xpose.msra.mxu0 0
        %362 = vmatprep.subr.bf16.mxu0 0
        %363 = vmatpush2.bf16.xpose.msra.mxu0 0
        %364 = vmatprep.subr.bf16.mxu0 0
        %365 = vmatpush2.bf16.xpose.msra.mxu0 0
        %366 = vmatprep.subr.bf16.mxu0 0
        %367 = vmatpush2.bf16.xpose.msra.mxu0 0
        %368 = vmatprep.subr.bf16.mxu0 0
        %369 = vmatpush2.bf16.xpose.msra.mxu0 0
        %370 = vmatprep.subr.bf16.mxu0 0
        %371 = vmatpush2.bf16.xpose.msra.mxu0 0
        %372 = vmatprep.subr.bf16.mxu0 0
        %373 = vmatpush2.bf16.xpose.msra.mxu0 0
        %374 = vmatprep.subr.bf16.mxu0 0
        %375 = vmatpush2.bf16.xpose.msra.mxu0 0
        %376 = vmatprep.mubr.bf16.mxu0 0
        %377 = vmatmul.mubr.bf16.gmra.mxu0 %v309
        %v378 = vpop.f32.mrf.mxu0
        %v379 = vadd.f32 0.0, %v378
        %v380 = vpop.f32.mrf.mxu0
        %v381 = vpop.f32.mrf.mxu0
        %v382 = vadd.f32 0.0, %v381
        %v383 = vpop.f32.mrf.mxu0
        %384 = vmatprep.mubr.bf16.mxu0 0
        %385 = vmatmul.mubr.bf16.gmra.mxu0 %v312
        %v386 = vpop.f32.mrf.mxu0
        %v387 = vadd.f32 0.0, %v386
        %v388 = vpop.f32.mrf.mxu0
        %v389 = vpop.f32.mrf.mxu0
        %v390 = vadd.f32 0.0, %v389
        %v391 = vpop.f32.mrf.mxu0
        %392 = vmatprep.mubr.bf16.mxu0 0
        %393 = vmatmul.mubr.bf16.gmra.mxu0 %v315
        %v394 = vpop.f32.mrf.mxu0
        %v395 = vadd.f32 0.0, %v394
        %v396 = vpop.f32.mrf.mxu0
        %v397 = vpop.f32.mrf.mxu0
        %v398 = vadd.f32 0.0, %v397
        %v399 = vpop.f32.mrf.mxu0
        %400 = vmatprep.mubr.bf16.mxu0 0
        %401 = vmatmul.mubr.bf16.gmra.mxu0 %v318
        %v402 = vpop.f32.mrf.mxu0
        %v403 = vadd.f32 0.0, %v402
        %v404 = vpop.f32.mrf.mxu0
        %v405 = vpop.f32.mrf.mxu0
        %v406 = vadd.f32 0.0, %v405
        %v407 = vpop.f32.mrf.mxu0
        %408 = vdwg.mxu0
        %v409 = vmul.f32 %v379, 2.0
        %v410 = vmul.f32 %v382, 2.0
        %v411 = vmul.f32 %v387, 2.0
        %v412 = vmul.f32 %v390, 2.0
        %v413 = vmul.f32 %v395, 2.0
        %v414 = vmul.f32 %v398, 2.0
        %v415 = vmul.f32 %v403, 2.0
        %v416 = vmul.f32 %v406, 2.0
        %v417 = vld [vmem:[%s220] sm:$0x1]
        %v419 = vlaneseq
        %v420 = vshrl.u32 %v419, 7
        %v421 = vsub.s32 0, %v420
        %v422 = vrot.slane %v417, %v421
        %v424 = vsub.f32 %v409, %v422
        %v425 = vsub.f32 %v410, %v422
        %v426 = vsub.f32 %v411, %v422
        %v427 = vsub.f32 %v412, %v422
        %v428 = vsub.f32 %v413, %v422
        %v429 = vsub.f32 %v414, %v422
        %v430 = vsub.f32 %v415, %v422
        %v431 = vsub.f32 %v416, %v422
        %v432 = vlaneseq
        %v433 = vand.u32 %v432, 127
        %s434 = smul.u32 %s22, 128
        %v435 = vstv %s434
        %v436 = vadd.s32 %v433, %v435
        %vm437 = vcmp.lt.s32.totalorder %v436, 200
        %v438 = vsel %vm437, %v424, -inf
        %v439 = vsel %vm437, %v425, -inf
        %v440 = vsel %vm437, %v426, -inf
        %v441 = vsel %vm437, %v427, -inf
        %v442 = vsel %vm437, %v428, -inf
        %v443 = vsel %vm437, %v429, -inf
        %v444 = vsel %vm437, %v430, -inf
        %v445 = vsel %vm437, %v431, -inf
        %v446 = vpack.c.bf16 %v439, %v438
        %v447 = vpack.c.bf16 %v441, %v440
        %v448 = vpack.c.bf16 %v443, %v442
        %v449 = vpack.c.bf16 %v445, %v444
        %v454 = vunpack.c.l.b16 %v446
        %v455 = vunpack.c.h.b16 %v446
        %v456 = vunpack.c.l.b16 %v447
        %v457 = vunpack.c.h.b16 %v447
        %v458 = vunpack.c.l.b16 %v448
        %v459 = vunpack.c.h.b16 %v448
        %v460 = vunpack.c.l.b16 %v449
        %v461 = vunpack.c.h.b16 %v449
        %v462 = vpack.c.b16 %v454, %v454
        %v463 = vpack.c.b16 %v455, %v455
        %v464 = vpack.c.b16 %v456, %v456
        %v465 = vpack.c.b16 %v457, %v457
        %v466 = vpack.c.b16 %v458, %v458
        %v467 = vpack.c.b16 %v459, %v459
        %v468 = vpack.c.b16 %v460, %v460
        %v469 = vpack.c.b16 %v461, %v461
        %478 = vst [vmem:[%s205] sm:$0xf] %v462
        %479 = vst [vmem:[%s205 + $0x4] sm:$0xf] %v463
        %480 = vst [vmem:[%s205 + $0x8] sm:$0xf] %v464
        %481 = vst [vmem:[%s205 + $0xc] sm:$0xf] %v465
        %482 = vst [vmem:[%s205 + $0x10] sm:$0xf] %v466
        %483 = vst [vmem:[%s205 + $0x14] sm:$0xf] %v467
        %484 = vst [vmem:[%s205 + $0x18] sm:$0xf] %v468
        %485 = vst [vmem:[%s205 + $0x1c] sm:$0xf] %v469
        %s486 = sand.u32 %s117, 1
        %s487 = scalar_lea.sflag [#allocation3], %s486
        %s488 = sand.u32 %s117, 1
        %s489 = smul.addr %s488, 32
        %s490 = scalar_lea.vmem [#allocation2], %s489
        // Predicated region
        $region33: #{tpu_custom_call.1} parent=31 // pred_check
          %p491 = pneg %p127
        $region34: #{tpu_custom_call.1} parent=31 // pred_check_branch
          %493 = sbr.rel (%p491) target = $region36
        $region35: #{tpu_custom_call.1} parent=31 // pred_region
          %s494 = smul.u32 8, %s21
          %s496 = ssub.s32 512, 512
          %497 = vsyncadd %s487, %s496
          %s498 = smul.addr %s494, 2
          %s499 = sadd.s32 %s22, %s498
          %s500 = smul.addr %s499, 64
          %s501 = scalar_lea.hbm %s3, %s500
          %s502 = sshll.u32 %s490, 4
          %s503 = int_to_ptr.vmem [resolvable:$true] %s502
          %508 = dma.vmem_to_hbm [thread:$0]  %s503, 512, %s501, %s487, 64, 128, 4
        $region36: #{tpu_custom_call.1} parent=31 // pred_fallthru
          _
      $region32: #{tpu_custom_call.1} parent=5 // pred_fallthru
        _
      %p509 = scmp.le.s32.totalorder 2, %s12
      // Predicated region
      $region37: #{tpu_custom_call.1} parent=5 // pred_check
        %p510 = pneg %p509
      $region38: #{tpu_custom_call.1} parent=5 // pred_check_branch
        %512 = sbr.rel (%p510) target = $region40
      $region39: #{tpu_custom_call.1} parent=5 // pred_region
        %s513 = ssub.s32 %s12, 2
        // Predicated region
        $region41: #{tpu_custom_call.1} parent=39 // pred_check
          %p514 = pneg %p133
        $region42: #{tpu_custom_call.1} parent=39 // pred_check_branch
          %516 = sbr.rel (%p514) target = $region44
        $region43: #{tpu_custom_call.1} parent=39 // pred_region
          %s517 = sand.u32 %s118, 1
          %s518 = scalar_lea.sflag [#allocation3], %s517
          %s519 = sand.u32 %s118, 1
          %s520 = smul.addr %s519, 32
          %s521 = scalar_lea.vmem [#allocation2], %s520
          %522 = dma.done %s518, 512
        $region44: #{tpu_custom_call.1} parent=39 // pred_fallthru
          _
      $region40: #{tpu_custom_call.1} parent=5 // pred_fallthru
        _
    $region6: #{tpu_custom_call.1} parent=1 // loop_footer
      %s16 = sadd.s32 1, %s12
    $region7: #{tpu_custom_call.1} parent=1 // loop_footer_branch
      %11 = sbr.rel target = $region3
    $region8: #{tpu_custom_call.1} parent=1 // loop_exit
      _
    %523 = vsyncpa [#allocation3], 1
    %s524 = scalar_lea.sflag [#allocation3], 1
    %525 = vsyncpa %s524, 1

</llo_original>
